<compile_context>
chip_gen: v7x
topology: tpu7x:2x2x1
jax: 0.10.0
libtpu: 0.0.40
codegen_flags: <defaults>
</compile_context>

<pallas_src>
import jax
import jax.numpy as jnp
from jax.experimental import pallas as pl
from jax.experimental.pallas import tpu as pltpu


LANE_CHUNK = 512  # in-kernel sub-chunk width (multiple of the 128-lane vreg)


def _round_up(x, m):
    return (x + m - 1) // m * m


def _make_mlp_kernel(chunk, num_chunks):
    """Kernel over one (2, TILE_B) x tile and the packed (20, 32) params.

    Layer 1 (K=2)  : broadcast-FMA on the VPU (MXU would be <1% utilized).
    Layer 2 (20x20): MXU matmul with f32 accumulation.
    Layer 3 (N=1)  : elementwise multiply + cross-sublane reduce (VPU/XLU).
    The TILE_B lanes are processed in `num_chunks` sub-chunks of `chunk` lanes
    so the working set stays inside the 64-entry vreg file (no spills).
    """

    def mlp_kernel(x_ref, p_ref, o_ref):
        # Unpack the resident parameter block once per grid step.
        P = p_ref[...]                 # (20, 32)
        w2t = P[:, 0:20]               # (20, 20)  == w2.T
        w1c0 = P[:, 20:21]             # (20, 1)   == w1.T[:, 0:1]
        w1c1 = P[:, 21:22]             # (20, 1)   == w1.T[:, 1:2]
        b1c = P[:, 22:23]              # (20, 1)
        b2c = P[:, 23:24]              # (20, 1)
        w3c = P[:, 24:25]              # (20, 1)
        b3v = P[0:1, 25:26]            # (1, 1)

        def body(c, carry):
            off = pl.multiple_of(c * chunk, chunk)
            x = x_ref[:, pl.ds(off, chunk)]            # (2, chunk)
            x0 = x[0:1, :]                             # (1, chunk)
            x1 = x[1:2, :]

            # ---- Linear(2, 20) + ReLU : K=2 broadcast-FMA, off the MXU ----
            h = jnp.maximum(w1c0 * x0 + w1c1 * x1 + b1c, 0.0)   # (20, chunk)

            # ---- Linear(20, 20) + ReLU : MXU, f32 accumulation ----
            h = jnp.dot(w2t, h, preferred_element_type=jnp.float32) + b2c
            h = jnp.maximum(h, 0.0)                             # (20, chunk)

            # ---- Linear(20, 1) : multiply + sublane reduction ----
            out = jnp.sum(w3c * h, axis=0, keepdims=True) + b3v  # (1, chunk)
            o_ref[:, pl.ds(off, chunk)] = out.astype(o_ref.dtype)
            return carry

        jax.lax.fori_loop(0, num_chunks, body, None,
                          unroll=num_chunks if num_chunks <= 8 else 8)

    return mlp_kernel


def _pack_params(w1, b1, w2, b2, w3, b3):
    """Pack all weights/biases into one (20, 32) f32 block.

    cols 0:20  -> w2.T        cols 20:22 -> w1.T
    col  22    -> b1          col  23    -> b2
    col  24    -> w3[:, 0]    [0, 25]    -> b3
    """
    P = jnp.zeros((20, 32), jnp.float32)
    P = P.at[:, 0:20].set(w2.T.astype(jnp.float32))
    P = P.at[:, 20:22].set(w1.T.astype(jnp.float32))
    P = P.at[:, 22].set(b1.astype(jnp.float32))
    P = P.at[:, 23].set(b2.astype(jnp.float32))
    P = P.at[:, 24].set(w3[:, 0].astype(jnp.float32))
    P = P.at[0, 25].set(b3.astype(jnp.float32)[0])
    return P


def simple_net_forward(x, w1, b1, w2, b2, w3, b3, *, block_b=32768):
    """x: (B, 2) f32 (PyTorch nn.Linear convention). Returns (B, 1) f32.

    Weights are (in_features, out_features); biases are (out_features,).
    The problem is transposed to feature-major (features on sublanes, batch on
    lanes) and tiled over the batch with a 1-D "parallel" grid. Call this from
    inside jax.jit (as done in __main__) so the transpose/pad of x fuses with
    its producer instead of costing a standalone HBM pass.
    """
    assert block_b % 128 == 0 and block_b > 0, "block_b must be a positive multiple of 128"
    B = x.shape[0]

    # ---- choose batch tiling -------------------------------------------------
    b_min = _round_up(B, 128)                       # lane-aligned batch extent
    n_tiles = max(pl.cdiv(b_min, block_b), 1)
    if n_tiles == 1 and b_min > 128:
        n_tiles = 2                                 # give v7x's 2nd TensorCore work
    tile_b = _round_up(pl.cdiv(b_min, n_tiles), 128)
    if tile_b > LANE_CHUNK:                         # keep tile a multiple of the chunk
        tile_b = _round_up(tile_b, LANE_CHUNK)
    b_pad = tile_b * n_tiles

    chunk = min(LANE_CHUNK, tile_b)
    num_chunks = tile_b // chunk

    # ---- feature-major inputs / packed params --------------------------------
    xt = jnp.pad(x.astype(jnp.float32).T, ((0, 0), (0, b_pad - B)))   # (2, b_pad)
    P = _pack_params(w1, b1, w2, b2, w3, b3)                          # (20, 32)

    resident = lambda i: (0, 0)   # constant block index -> params DMA'd once

    out_t = pl.pallas_call(
        _make_mlp_kernel(chunk, num_chunks),
        out_shape=jax.ShapeDtypeStruct((1, b_pad), jnp.float32),
        grid=(n_tiles,),
        in_specs=[
            pl.BlockSpec((2, tile_b), lambda i: (0, i)),   # x tile, pipelined
            pl.BlockSpec((20, 32), resident),              # packed params, resident
        ],
        out_specs=pl.BlockSpec((1, tile_b), lambda i: (0, i)),
        compiler_params=pltpu.CompilerParams(
            dimension_semantics=("parallel",)),            # split tiles across TCs (v7x)
        cost_estimate=pl.CostEstimate(
            flops=920 * b_pad, transcendentals=0, bytes_accessed=12 * b_pad),
    )(xt, P)

    return out_t[:, :B].T                                  # (B, 1)


def init_params(key):
    # Deterministic init mimicking PyTorch's default Linear init
    # (uniform(-1/sqrt(fan_in), 1/sqrt(fan_in))). Weights stored as
    # (in_features, out_features), biases as (out_features,).
    def linear(key, fan_in, fan_out):
        kw, kb = jax.random.split(key)
        bound = 1.0 / jnp.sqrt(jnp.float32(fan_in))
        w = jax.random.uniform(kw, (fan_in, fan_out), jnp.float32, -bound, bound)
        b = jax.random.uniform(kb, (fan_out,), jnp.float32, -bound, bound)
        return w, b

    k1, k2, k3 = jax.random.split(key, 3)
    w1, b1 = linear(k1, 2, 20)
    w2, b2 = linear(k2, 20, 20)
    w3, b3 = linear(k3, 20, 1)
    return w1, b1, w2, b2, w3, b3


if __name__ == "__main__":
    key = jax.random.PRNGKey(0)
    k_params, k_x = jax.random.split(key)
    params = init_params(k_params)

    # Small batch of 2-feature inputs, consistent with nn.Linear(2, ...)
    x = jax.random.normal(k_x, (8, 2), dtype=jnp.float32)

    # Jit the whole forward so the feature-major transpose/pad fuses with the
    # producer of x instead of being a standalone HBM pass.
    fwd = jax.jit(simple_net_forward)
    out = jax.block_until_ready(fwd(x, *params))

    # Pure-JAX reference of the same math.
    w1, b1, w2, b2, w3, b3 = params
    ref = jnp.maximum(x @ w1 + b1, 0.0)
    ref = jnp.maximum(ref @ w2 + b2, 0.0)
    ref = ref @ w3 + b3
    assert out.shape == (8, 1)
    assert jnp.allclose(out, ref, atol=1e-5, rtol=1e-5)

    print("KERNEL_OK")
</pallas_src>

<mosaic_0001>
module attributes {stable_mosaic.version = 11 : i64} {
  func.func @mlp_kernel(%arg0: i32, %arg1: memref<2x128xf32, #tpu.memory_space<vmem>>, %arg2: memref<20x32xf32, #tpu.memory_space<vmem>>, %arg3: memref<1x128xf32, #tpu.memory_space<vmem>>) attributes {dimension_semantics = [#tpu.dimension_semantics<parallel>], iteration_bounds = array<i64: 1>, scalar_prefetch = 0 : i64, scratch_operands = 0 : i64, tpu.core_type = #tpu.core_type<tc>, window_params = [{transform_indices = @transform_0, window_bounds = array<i64: 2, 128>}, {pipeline_mode = #tpu.pipeline_mode<synchronous>, transform_indices = @transform_1, window_bounds = array<i64: 20, 32>}, {transform_indices = @transform_2, window_bounds = array<i64: 1, 128>}]} {
    %c0 = arith.constant 0 : index
    %c0_0 = arith.constant 0 : index
    %0 = vector.load %arg2[%c0, %c0_0] : memref<20x32xf32, #tpu.memory_space<vmem>>, vector<20x32xf32>
    %1 = vector.extract_strided_slice %0 {offsets = [0, 0], sizes = [20, 20], strides = [1, 1]} : vector<20x32xf32> to vector<20x20xf32>
    %2 = vector.extract_strided_slice %0 {offsets = [0, 20], sizes = [20, 1], strides = [1, 1]} : vector<20x32xf32> to vector<20x1xf32>
    %3 = vector.extract_strided_slice %0 {offsets = [0, 21], sizes = [20, 1], strides = [1, 1]} : vector<20x32xf32> to vector<20x1xf32>
    %4 = vector.extract_strided_slice %0 {offsets = [0, 22], sizes = [20, 1], strides = [1, 1]} : vector<20x32xf32> to vector<20x1xf32>
    %5 = vector.extract_strided_slice %0 {offsets = [0, 23], sizes = [20, 1], strides = [1, 1]} : vector<20x32xf32> to vector<20x1xf32>
    %6 = vector.extract_strided_slice %0 {offsets = [0, 24], sizes = [20, 1], strides = [1, 1]} : vector<20x32xf32> to vector<20x1xf32>
    %7 = vector.extract_strided_slice %0 {offsets = [0, 25], sizes = [1, 1], strides = [1, 1]} : vector<20x32xf32> to vector<1x1xf32>
    %c0_i32 = arith.constant 0 : i32
    %c128_i32 = arith.constant 128 : i32
    %8 = arith.muli %c0_i32, %c128_i32 : i32
    %9 = tpu.assume_multiple %8, 128 : i32
    %c0_1 = arith.constant 0 : index
    %10 = arith.index_cast %9 : i32 to index
    %11 = vector.load %arg1[%c0_1, %10] : memref<2x128xf32, #tpu.memory_space<vmem>>, vector<2x128xf32>
    %12 = vector.extract_strided_slice %11 {offsets = [0, 0], sizes = [1, 128], strides = [1, 1]} : vector<2x128xf32> to vector<1x128xf32>
    %13 = vector.extract_strided_slice %11 {offsets = [1, 0], sizes = [1, 128], strides = [1, 1]} : vector<2x128xf32> to vector<1x128xf32>
    %14 = vector.broadcast %2 : vector<20x1xf32> to vector<20x128xf32>
    %15 = vector.broadcast %12 : vector<1x128xf32> to vector<20x128xf32>
    %16 = arith.mulf %14, %15 : vector<20x128xf32>
    %17 = vector.broadcast %3 : vector<20x1xf32> to vector<20x128xf32>
    %18 = vector.broadcast %13 : vector<1x128xf32> to vector<20x128xf32>
    %19 = arith.mulf %17, %18 : vector<20x128xf32>
    %20 = arith.addf %16, %19 : vector<20x128xf32>
    %21 = vector.broadcast %4 : vector<20x1xf32> to vector<20x128xf32>
    %22 = arith.addf %20, %21 : vector<20x128xf32>
    %cst = arith.constant 0.000000e+00 : f32
    %23 = vector.broadcast %cst : f32 to vector<20x128xf32>
    %24 = arith.maximumf %22, %23 : vector<20x128xf32>
    %cst_2 = arith.constant dense<0.000000e+00> : vector<20x128xf32>
    %25 = tpu.matmul %1, %24, %cst_2 {dimension_numbers = #tpu.dot_dimension_numbers<[1], [0], [0], [1], [0, 0, 1, 1], [], []>} : vector<20x20xf32>, vector<20x128xf32>, vector<20x128xf32> -> vector<20x128xf32>
    %26 = vector.broadcast %5 : vector<20x1xf32> to vector<20x128xf32>
    %27 = arith.addf %25, %26 : vector<20x128xf32>
    %cst_3 = arith.constant 0.000000e+00 : f32
    %28 = vector.broadcast %cst_3 : f32 to vector<20x128xf32>
    %29 = arith.maximumf %27, %28 : vector<20x128xf32>
    %30 = vector.broadcast %6 : vector<20x1xf32> to vector<20x128xf32>
    %31 = arith.mulf %30, %29 : vector<20x128xf32>
    %cst_4 = arith.constant dense<0.000000e+00> : vector<128xf32>
    %32 = vector.multi_reduction <add>, %31, %cst_4 [0] : vector<20x128xf32> to vector<128xf32>
    %33 = vector.shape_cast %32 : vector<128xf32> to vector<1x128xf32>
    %34 = vector.broadcast %7 : vector<1x1xf32> to vector<1x128xf32>
    %35 = arith.addf %33, %34 : vector<1x128xf32>
    %c0_5 = arith.constant 0 : index
    %36 = arith.index_cast %9 : i32 to index
    %37 = vector.load %arg3[%c0_5, %36] : memref<1x128xf32, #tpu.memory_space<vmem>>, vector<1x128xf32>
    tpu.vector_store %arg3[%c0_5, %36], %35 {strides = array<i32>} : memref<1x128xf32, #tpu.memory_space<vmem>>, vector<1x128xf32>,
    %c1_i32 = arith.constant 1 : i32
    return
  }
  func.func @transform_0(%arg0: i32) -> (i32, i32) {
    %c0_i32 = arith.constant 0 : i32
    %c0_i32_0 = arith.constant 0 : i32
    return %c0_i32, %arg0 : i32, i32
  }
  func.func @transform_1(%arg0: i32) -> (i32, i32) {
    %c0_i32 = arith.constant 0 : i32
    %c0_i32_0 = arith.constant 0 : i32
    %c0_i32_1 = arith.constant 0 : i32
    return %c0_i32, %c0_i32_0 : i32, i32
  }
  func.func @transform_2(%arg0: i32) -> (i32, i32) {
    %c0_i32 = arith.constant 0 : i32
    %c0_i32_0 = arith.constant 0 : i32
    return %c0_i32, %arg0 : i32, i32
  }
}

</mosaic_0001>

<llo_original>
// kernel: simple_net_forward.1
$region0: #{simple_net_forward.1}
  #allocation0 [shape = 'u32[]', space=smem, size = 0x4, offset = 0x4, fixed_abs, tag = 'smem constant byte address 0x4 - core index']
  #allocation1 [shape = 'u32[144,128]{1,0:T(1,128)}', space=vmem, size = 0x12000, scoped, tag = 'internal scratch']
  %s0 = inlined_call_operand.vmem [shape: f32[2,128], index: 0, kind: input, shape index: {}]
  %s1 = inlined_call_operand.vmem [shape: f32[20,32], index: 1, kind: input, shape index: {}]
  %s2 = inlined_call_operand.vmem [shape: f32[1,128], index: 2, kind: output, shape index: {}]
  %s3 = sld [smem:[#allocation0]]
  $region18: #{simple_net_forward.1} parent=0
    _
  %s5 = ssub.s32 1, %s3
  %s6 = scalar_select 0, %s5, %s3
  // Predicated region
  $region2: #{simple_net_forward.1} parent=0 // pred_check
    _
  $region3: #{simple_net_forward.1} parent=0 // pred_check_branch
    %8 = sbr.rel (0) target = $region5
  $region4: #{simple_net_forward.1} parent=0 // pred_region
    _
  $region5: #{simple_net_forward.1} parent=0 // pred_fallthru
    _
  // Predicated region
  $region6: #{simple_net_forward.1} parent=0 // pred_check
    _
  $region7: #{simple_net_forward.1} parent=0 // pred_check_branch
    %10 = sbr.rel (0) target = $region9
  $region8: #{simple_net_forward.1} parent=0 // pred_region
    _
  $region9: #{simple_net_forward.1} parent=0 // pred_fallthru
    _
  %v11 = vld [vmem:[%s1] sm:$0xff]
  %v12 = vld [vmem:[%s1 + $0x8] sm:$0xff]
  %v13 = vld [vmem:[%s1 + $0x10] sm:$0xf]
  %v14 = vld [vmem:[%s0] sm:$0x3]
  %16 = vset.pattern.permute.xlu0 20
  %17 = vperm.xlu0 %16, %v11
  %v18 = vpop.permute.xlu0 %17
  %21 = vset.pattern.permute.xlu0 20
  %22 = vperm.xlu0 %21, %v12
  %v23 = vpop.permute.xlu0 %22
  %26 = vset.pattern.permute.xlu0 20
  %27 = vperm.xlu0 %26, %v13
  %v28 = vpop.permute.xlu0 %27
  %v30 = vlaneseq
  %v31 = vshrl.u32 %v30, 7
  %v32 = vsub.s32 0, %v31
  %v33 = vrot.slane %v14, %v32
  %v34 = vmul.f32 %v18, %v33
  %v35 = vmul.f32 %v23, %v33
  %v36 = vmul.f32 %v28, %v33
  %37 = vset.pattern.permute.xlu0 21
  %38 = vperm.xlu0 %37, %v11
  %v39 = vpop.permute.xlu0 %38
  %41 = vset.pattern.permute.xlu0 21
  %42 = vperm.xlu0 %41, %v12
  %v43 = vpop.permute.xlu0 %42
  %45 = vset.pattern.permute.xlu0 21
  %46 = vperm.xlu0 %45, %v13
  %v47 = vpop.permute.xlu0 %46
  %v49 = vlaneseq
  %v50 = vshrl.u32 %v49, 7
  %v51 = vsub.s32 1, %v50
  %v52 = vrot.slane %v14, %v51
  %v53 = vmul.f32 %v39, %v52
  %v54 = vmul.f32 %v43, %v52
  %v55 = vmul.f32 %v47, %v52
  %v56 = vadd.f32 %v34, %v53
  %v57 = vadd.f32 %v35, %v54
  %v58 = vadd.f32 %v36, %v55
  %59 = vset.pattern.permute.xlu0 22
  %60 = vperm.xlu0 %59, %v11
  %v61 = vpop.permute.xlu0 %60
  %63 = vset.pattern.permute.xlu0 22
  %64 = vperm.xlu0 %63, %v12
  %v65 = vpop.permute.xlu0 %64
  %67 = vset.pattern.permute.xlu0 22
  %68 = vperm.xlu0 %67, %v13
  %v69 = vpop.permute.xlu0 %68
  %v71 = vadd.f32 %v56, %v61
  %v72 = vadd.f32 %v57, %v65
  %v73 = vadd.f32 %v58, %v69
  %v74 = vmax.f32 %v71, 0.0
  %v75 = vmax.f32 %v72, 0.0
  %v76 = vmax.f32 %v73, 0.0
  %77 = vset.pattern.permute.xlu0 23
  %78 = vperm.xlu0 %77, %v11
  %v79 = vpop.permute.xlu0 %78
  %81 = vset.pattern.permute.xlu0 23
  %82 = vperm.xlu0 %81, %v12
  %v83 = vpop.permute.xlu0 %82
  %85 = vset.pattern.permute.xlu0 23
  %86 = vperm.xlu0 %85, %v13
  %v87 = vpop.permute.xlu0 %86
  %vm89 = vcmask 162816
  %v90 = vsel %vm89, %v11, 0
  %v92 = vsel %vm89, %v12, 0
  %v94 = vsel %vm89, %v13, 0
  %vm96 = vcmask 1043456
  %v98 = vsel %vm96, %v76, 0
  %100 = vmatprep.subr.mxu0 0.0
  %101 = vmatpush1.msra.mxu0 %v74
  %102 = vmatprep.subr.mxu0 0.0
  %103 = vmatpush1.msra.mxu0 %v75
  %104 = vmatprep.subr.mxu0 0.0
  %105 = vmatpush1.msra.mxu0 %v98
  %106 = vmatprep.subr.mxu0 0.0
  %107 = vmatpush1.msra.mxu0 0.0
  %108 = vmatprep.subr.mxu0 0.0
  %109 = vmatpush1.msra.mxu0 0.0
  %110 = vmatprep.subr.mxu0 0.0
  %111 = vmatpush1.msra.mxu0 0.0
  %112 = vmatprep.subr.mxu0 0.0
  %113 = vmatpush1.msra.mxu0 0.0
  %114 = vmatprep.subr.mxu0 0.0
  %115 = vmatpush1.msra.mxu0 0.0
  %116 = vmatprep.subr.mxu0 0.0
  %117 = vmatpush1.msra.mxu0 0.0
  %118 = vmatprep.subr.mxu0 0.0
  %119 = vmatpush1.msra.mxu0 0.0
  %120 = vmatprep.subr.mxu0 0.0
  %121 = vmatpush1.msra.mxu0 0.0
  %122 = vmatprep.subr.mxu0 0.0
  %123 = vmatpush1.msra.mxu0 0.0
  %124 = vmatprep.subr.mxu0 0.0
  %125 = vmatpush1.msra.mxu0 0.0
  %126 = vmatprep.subr.mxu0 0.0
  %127 = vmatpush1.msra.mxu0 0.0
  %128 = vmatprep.subr.mxu0 0.0
  %129 = vmatpush1.msra.mxu0 0.0
  %130 = vmatprep.subr.mxu0 0.0
  %131 = vmatpush1.msra.mxu0 0.0
  %132 = vmatprep.subr.mxu0 0.0
  %133 = vmatpush1.msra.mxu0 0.0
  %134 = vmatprep.subr.mxu0 0.0
  %135 = vmatpush1.msra.mxu0 0.0
  %136 = vmatprep.subr.mxu0 0.0
  %137 = vmatpush1.msra.mxu0 0.0
  %138 = vmatprep.subr.mxu0 0.0
  %139 = vmatpush1.msra.mxu0 0.0
  %140 = vmatprep.subr.mxu0 0.0
  %141 = vmatpush1.msra.mxu0 0.0
  %142 = vmatprep.subr.mxu0 0.0
  %143 = vmatpush1.msra.mxu0 0.0
  %144 = vmatprep.subr.mxu0 0.0
  %145 = vmatpush1.msra.mxu0 0.0
  %146 = vmatprep.subr.mxu0 0.0
  %147 = vmatpush1.msra.mxu0 0.0
  %148 = vmatprep.subr.mxu0 0.0
  %149 = vmatpush1.msra.mxu0 0.0
  %150 = vmatprep.subr.mxu0 0.0
  %151 = vmatpush1.msra.mxu0 0.0
  %152 = vmatprep.subr.mxu0 0.0
  %153 = vmatpush1.msra.mxu0 0.0
  %154 = vmatprep.subr.mxu0 0.0
  %155 = vmatpush1.msra.mxu0 0.0
  %156 = vmatprep.subr.mxu0 0.0
  %157 = vmatpush1.msra.mxu0 0.0
  %158 = vmatprep.subr.mxu0 0.0
  %159 = vmatpush1.msra.mxu0 0.0
  %160 = vmatprep.subr.mxu0 0.0
  %161 = vmatpush1.msra.mxu0 0.0
  %162 = vmatprep.subr.mxu0 0.0
  %163 = vmatpush1.msra.mxu0 0.0
  %164 = vmatprep.mubr.f32.mxu0 0.0
  %165 = vmatmul.mubr.f32.gmra.mrb[0].mxu0 %v90
  %v166 = vpop.f32.mrb[0].mxu0
  %v167 = vadd.f32 %v79, %v166
  %v168 = vpop.f32.mrb[0].mxu0
  %169 = vmatprep.mubr.f32.mxu0 0.0
  %170 = vmatmul.mubr.f32.gmra.mrb[0].mxu0 %v92
  %v171 = vpop.f32.mrb[0].mxu0
  %v172 = vadd.f32 %v83, %v171
  %v173 = vpop.f32.mrb[0].mxu0
  %174 = vmatprep.mubr.f32.mxu0 0.0
  %175 = vmatmul.mubr.f32.gmra.mrb[0].mxu0 %v94
  %v176 = vpop.f32.mrb[0].mxu0
  %v177 = vadd.f32 %v87, %v176
  %v178 = vpop.f32.mrb[0].mxu0
  %179 = vdwg.mxu0
  %v180 = vmax.f32 %v167, 0.0
  %v181 = vmax.f32 %v172, 0.0
  %v182 = vmax.f32 %v177, 0.0
  %183 = vset.pattern.permute.xlu0 24
  %184 = vperm.xlu0 %183, %v11
  %v185 = vpop.permute.xlu0 %184
  %187 = vset.pattern.permute.xlu0 24
  %188 = vperm.xlu0 %187, %v12
  %v189 = vpop.permute.xlu0 %188
  %191 = vset.pattern.permute.xlu0 24
  %192 = vperm.xlu0 %191, %v13
  %v193 = vpop.permute.xlu0 %192
  %v195 = vmul.f32 %v185, %v180
  %v196 = vmul.f32 %v189, %v181
  %v197 = vmul.f32 %v193, %v182
  %v198 = vadd.f32 %v195, %v196
  %v199 = vsel %vm96, %v197, 0.0
  %v200 = vadd.f32 %v198, %v199
  %v201 = vrot.slane %v200, 4
  %v202 = vadd.f32 %v200, %v201
  %v203 = vrot.slane %v202, 2
  %v204 = vadd.f32 %v202, %v203
  %v205 = vrot.slane %v204, 1
  %v206 = vadd.f32 %v204, %v205
  %207 = vset.pattern.permute.xlu0 25
  %208 = vperm.xlu0 %207, %v11
  %v209 = vpop.permute.xlu0 %208
  %v211 = vadd.f32 %v206, %v209
  %212 = vst [vmem:[%s2] sm:$0x1] %v211
  // Predicated region
  $region10: #{simple_net_forward.1} parent=0 // pred_check
    _
  $region11: #{simple_net_forward.1} parent=0 // pred_check_branch
    %214 = sbr.rel (0) target = $region13
  $region12: #{simple_net_forward.1} parent=0 // pred_region
    _
  $region13: #{simple_net_forward.1} parent=0 // pred_fallthru
    _
  // Predicated region
  $region14: #{simple_net_forward.1} parent=0 // pred_check
    _
  $region15: #{simple_net_forward.1} parent=0 // pred_check_branch
    %216 = sbr.rel (0) target = $region17
  $region16: #{simple_net_forward.1} parent=0 // pred_region
    _
  $region17: #{simple_net_forward.1} parent=0 // pred_fallthru
    _

</llo_original>
